<compile_context>
chip_gen: v7x
topology: tpu7x:2x2x1
jax: 0.10.0
libtpu: 0.0.40
codegen_flags: <defaults>
</compile_context>

<pallas_src>
import math

import jax
import jax.numpy as jnp
from jax.experimental import pallas as pl
from jax.experimental.pallas import tpu as pltpu


def _round_up(v: int, m: int) -> int:
    return -(-v // m) * m


# ----------------- pass 1: xw = x @ W (+ b), computed once ------------------

def _xw_bias_kernel(x_ref, w_ref, b_ref, o_ref):
    xw = jnp.dot(x_ref[...], w_ref[...], preferred_element_type=jnp.float32)
    o_ref[...] = (xw + b_ref[...].astype(jnp.float32)).astype(o_ref.dtype)


def _xw_kernel(x_ref, w_ref, o_ref):
    o_ref[...] = jnp.dot(
        x_ref[...], w_ref[...], preferred_element_type=jnp.float32
    ).astype(o_ref.dtype)


# ----------------- pass 2: y = G @ xw, tiled with f32 accumulator -----------

def _propagate_kernel(g_ref, xw_ref, o_ref, acc_ref):
    @pl.when(pl.program_id(1) == 0)
    def _():
        acc_ref[...] = jnp.zeros_like(acc_ref)

    acc_ref[...] += jnp.dot(
        g_ref[...], xw_ref[...], preferred_element_type=jnp.float32
    )

    @pl.when(pl.program_id(1) == pl.num_programs(1) - 1)
    def _():
        o_ref[...] = acc_ref[...].astype(o_ref.dtype)


def hgnn_conv(x, weight, bias, G, *, compute_dtype=None,
              vmem_limit_bytes=32 * 1024 * 1024):
    """y = G @ (x @ weight + bias). bias may be None.

    compute_dtype: dtype of the MXU operands (e.g. jnp.bfloat16 for full-rate
    MXU / halved HBM traffic on the dominant G stream). Accumulation is always
    f32; output dtype matches x.dtype.
    """
    N, in_ft = x.shape
    out_ft = weight.shape[1]
    assert weight.shape[0] == in_ft
    assert G.shape == (N, N)

    out_dtype = x.dtype
    cdt = jnp.dtype(compute_dtype) if compute_dtype is not None else jnp.dtype(x.dtype)
    dsize = cdt.itemsize

    # --- lane / MXU friendly padding & tile sizes ---------------------------
    out_ft_p = _round_up(out_ft, 128)            # lane-dense intermediate + output
    tm = 256 if N >= 256 else _round_up(N, 8)    # output-row tile (sublane mult of 8)
    tk = 256 if N >= 256 else _round_up(N, 128)  # reduction tile (lane mult of 128)
    n_rows_p = _round_up(N, tm)                  # padded output rows
    n_cols_p = _round_up(N, tk)                  # padded reduction extent

    x_p = jnp.zeros((n_cols_p, in_ft), cdt).at[:N, :].set(x.astype(cdt))
    w_p = jnp.zeros((in_ft, out_ft_p), cdt).at[:, :out_ft].set(weight.astype(cdt))
    g_p = jnp.zeros((n_rows_p, n_cols_p), cdt).at[:N, :N].set(G.astype(cdt))

    # ----------------------------- pass 1 -----------------------------------
    tr = tk  # x row tile; divides n_cols_p and is a multiple of 8
    xw_cost = pl.CostEstimate(
        flops=2 * n_cols_p * in_ft * out_ft_p,
        transcendentals=0,
        bytes_accessed=(n_cols_p * in_ft + in_ft * out_ft_p
                        + n_cols_p * out_ft_p) * dsize,
    )
    common_params = pltpu.CompilerParams(
        dimension_semantics=("parallel",),
        vmem_limit_bytes=vmem_limit_bytes,
    )
    if bias is not None:
        b_p = jnp.zeros((1, out_ft_p), jnp.float32).at[0, :out_ft].set(
            bias.reshape(out_ft).astype(jnp.float32))
        xw = pl.pallas_call(
            _xw_bias_kernel,
            out_shape=jax.ShapeDtypeStruct((n_cols_p, out_ft_p), cdt),
            grid_spec=pltpu.PrefetchScalarGridSpec(
                num_scalar_prefetch=0,
                grid=(n_cols_p // tr,),
                in_specs=[
                    pl.BlockSpec((tr, in_ft), lambda r: (r, 0)),
                    pl.BlockSpec((in_ft, out_ft_p), lambda r: (0, 0)),
                    pl.BlockSpec((1, out_ft_p), lambda r: (0, 0)),
                ],
                out_specs=pl.BlockSpec((tr, out_ft_p), lambda r: (r, 0)),
            ),
            compiler_params=common_params,
            cost_estimate=xw_cost,
        )(x_p, w_p, b_p)
    else:
        # Skip the bias add entirely when bias is None (no zeros(1,out_ft) add).
        xw = pl.pallas_call(
            _xw_kernel,
            out_shape=jax.ShapeDtypeStruct((n_cols_p, out_ft_p), cdt),
            grid_spec=pltpu.PrefetchScalarGridSpec(
                num_scalar_prefetch=0,
                grid=(n_cols_p // tr,),
                in_specs=[
                    pl.BlockSpec((tr, in_ft), lambda r: (r, 0)),
                    pl.BlockSpec((in_ft, out_ft_p), lambda r: (0, 0)),
                ],
                out_specs=pl.BlockSpec((tr, out_ft_p), lambda r: (r, 0)),
            ),
            compiler_params=common_params,
            cost_estimate=xw_cost,
        )(x_p, w_p)

    # ----------------------------- pass 2 -----------------------------------
    prop_cost = pl.CostEstimate(
        flops=2 * n_rows_p * n_cols_p * out_ft_p,
        transcendentals=0,
        bytes_accessed=(n_rows_p * n_cols_p + n_cols_p * out_ft_p) * dsize
        + n_rows_p * out_ft_p * jnp.dtype(out_dtype).itemsize,
    )
    y_p = pl.pallas_call(
        _propagate_kernel,
        out_shape=jax.ShapeDtypeStruct((n_rows_p, out_ft_p), out_dtype),
        grid_spec=pltpu.PrefetchScalarGridSpec(
            num_scalar_prefetch=0,
            grid=(n_rows_p // tm, n_cols_p // tk),
            in_specs=[
                pl.BlockSpec((tm, tk), lambda i, k: (i, k)),          # G tile
                pl.BlockSpec((tk, out_ft_p), lambda i, k: (k, 0)),    # xw tile
            ],
            out_specs=pl.BlockSpec((tm, out_ft_p), lambda i, k: (i, 0)),
            scratch_shapes=[pltpu.VMEM((tm, out_ft_p), jnp.float32)],
        ),
        compiler_params=pltpu.CompilerParams(
            dimension_semantics=("parallel", "arbitrary"),
            vmem_limit_bytes=vmem_limit_bytes,
        ),
        cost_estimate=prop_cost,
    )(g_p, xw)

    return y_p[:N, :out_ft]


if __name__ == "__main__":
    # Small shapes consistent with the module: N nodes, in_ft -> out_ft.
    # Deliberately non-aligned (out_ft=72, in_ft=40) to exercise padding,
    # and N=512 to exercise a real (2, 2) tiled grid.
    N, in_ft, out_ft = 512, 40, 72
    dtype = jnp.float32

    key = jax.random.PRNGKey(0)
    k_x, k_g, k_w, k_b = jax.random.split(key, 4)

    # Deterministic parameter init mimicking reset_parameters():
    # uniform(-stdv, stdv) with stdv = 1/sqrt(out_ft).
    stdv = 1.0 / math.sqrt(out_ft)
    weight = jax.random.uniform(k_w, (in_ft, out_ft), dtype, minval=-stdv, maxval=stdv)
    bias = jax.random.uniform(k_b, (out_ft,), dtype, minval=-stdv, maxval=stdv)

    x = jax.random.normal(k_x, (N, in_ft), dtype)
    G = jax.random.normal(k_g, (N, N), dtype)

    # High-precision reference of the forward semantics: y = G @ (x @ W + b).
    hp = jax.lax.Precision.HIGHEST
    y_ref = jnp.matmul(G, jnp.matmul(x, weight, precision=hp) + bias, precision=hp)
    y_ref_nb = jnp.matmul(G, jnp.matmul(x, weight, precision=hp), precision=hp)

    # f32 path (exact module semantics).
    y32 = jax.block_until_ready(hgnn_conv(x, weight, bias, G))
    assert y32.shape == (N, out_ft)
    rel = jnp.linalg.norm(y32 - y_ref) / jnp.linalg.norm(y_ref)
    assert rel < 1e-3, f"f32 mismatch rel={rel}"

    # bias=None path.
    y_nb = jax.block_until_ready(hgnn_conv(x, weight, None, G))
    rel_nb = jnp.linalg.norm(y_nb - y_ref_nb) / jnp.linalg.norm(y_ref_nb)
    assert rel_nb < 1e-3, f"no-bias mismatch rel={rel_nb}"

    # bf16 compute path (full-rate MXU / half HBM bytes on G), f32 accumulation.
    y16 = jax.block_until_ready(
        hgnn_conv(x, weight, bias, G, compute_dtype=jnp.bfloat16))
    rel16 = jnp.linalg.norm(y16.astype(jnp.float32) - y_ref) / jnp.linalg.norm(y_ref)
    assert rel16 < 3e-2, f"bf16 mismatch rel={rel16}"

    print("KERNEL_OK")
</pallas_src>

<mosaic_0001>
module attributes {stable_mosaic.version = 11 : i64} {
  func.func @_xw_bias_kernel(%arg0: i32, %arg1: memref<256x40xf32, #tpu.memory_space<vmem>>, %arg2: memref<40x128xf32, #tpu.memory_space<vmem>>, %arg3: memref<1x128xf32, #tpu.memory_space<vmem>>, %arg4: memref<256x128xf32, #tpu.memory_space<vmem>>) attributes {dimension_semantics = [#tpu.dimension_semantics<parallel>], iteration_bounds = array<i64: 2>, scalar_prefetch = 0 : i64, scratch_operands = 0 : i64, tpu.core_type = #tpu.core_type<tc>, window_params = [{transform_indices = @transform_0, window_bounds = array<i64: 256, 40>}, {pipeline_mode = #tpu.pipeline_mode<synchronous>, transform_indices = @transform_1, window_bounds = array<i64: 40, 128>}, {pipeline_mode = #tpu.pipeline_mode<synchronous>, transform_indices = @transform_2, window_bounds = array<i64: 1, 128>}, {transform_indices = @transform_3, window_bounds = array<i64: 256, 128>}]} {
    %c0 = arith.constant 0 : index
    %c0_0 = arith.constant 0 : index
    %0 = vector.load %arg1[%c0, %c0_0] : memref<256x40xf32, #tpu.memory_space<vmem>>, vector<256x40xf32>
    %c0_1 = arith.constant 0 : index
    %c0_2 = arith.constant 0 : index
    %1 = vector.load %arg2[%c0_1, %c0_2] : memref<40x128xf32, #tpu.memory_space<vmem>>, vector<40x128xf32>
    %cst = arith.constant dense<0.000000e+00> : vector<256x128xf32>
    %2 = tpu.matmul %0, %1, %cst {dimension_numbers = #tpu.dot_dimension_numbers<[1], [0], [0], [1], [0, 0, 1, 1], [], []>} : vector<256x40xf32>, vector<40x128xf32>, vector<256x128xf32> -> vector<256x128xf32>
    %c0_3 = arith.constant 0 : index
    %c0_4 = arith.constant 0 : index
    %3 = vector.load %arg3[%c0_3, %c0_4] : memref<1x128xf32, #tpu.memory_space<vmem>>, vector<1x128xf32>
    %4 = vector.broadcast %3 : vector<1x128xf32> to vector<256x128xf32>
    %5 = arith.addf %2, %4 : vector<256x128xf32>
    %c0_5 = arith.constant 0 : index
    %c0_6 = arith.constant 0 : index
    %6 = vector.load %arg4[%c0_5, %c0_6] : memref<256x128xf32, #tpu.memory_space<vmem>>, vector<256x128xf32>
    tpu.vector_store %arg4[%c0_5, %c0_6], %5 {strides = array<i32>} : memref<256x128xf32, #tpu.memory_space<vmem>>, vector<256x128xf32>,
    return
  }
  func.func @transform_0(%arg0: i32) -> (i32, i32) {
    %c0_i32 = arith.constant 0 : i32
    %c0_i32_0 = arith.constant 0 : i32
    return %arg0, %c0_i32 : i32, i32
  }
  func.func @transform_1(%arg0: i32) -> (i32, i32) {
    %c0_i32 = arith.constant 0 : i32
    %c0_i32_0 = arith.constant 0 : i32
    %c0_i32_1 = arith.constant 0 : i32
    return %c0_i32, %c0_i32_0 : i32, i32
  }
  func.func @transform_2(%arg0: i32) -> (i32, i32) {
    %c0_i32 = arith.constant 0 : i32
    %c0_i32_0 = arith.constant 0 : i32
    %c0_i32_1 = arith.constant 0 : i32
    return %c0_i32, %c0_i32_0 : i32, i32
  }
  func.func @transform_3(%arg0: i32) -> (i32, i32) {
    %c0_i32 = arith.constant 0 : i32
    %c0_i32_0 = arith.constant 0 : i32
    return %arg0, %c0_i32 : i32, i32
  }
}

</mosaic_0001>

<llo_original>
// kernel: tpu_custom_call.1
$region0: #{tpu_custom_call.1}
  #allocation0 [shape = 'u32[]', space=smem, size = 0x4, offset = 0x4, fixed_abs, tag = 'smem constant byte address 0x4 - core index']
  #allocation1 [shape = 'u32[144,128]{1,0:T(1,128)}', space=vmem, size = 0x12000, scoped, tag = 'internal scratch']
  %s0 = inlined_call_operand.vmem [shape: f32[512,40], index: 0, kind: input, shape index: {}]
  %s1 = inlined_call_operand.vmem [shape: f32[40,128], index: 1, kind: input, shape index: {}]
  %s2 = inlined_call_operand.vmem [shape: f32[1,128], index: 2, kind: input, shape index: {}]
  %s3 = inlined_call_operand.hbm [shape: f32[512,128], index: 3, kind: output, shape index: {}]
  %s4 = sld [smem:[#allocation0]]
  $region45: #{tpu_custom_call.1} parent=0
    _
  %s6 = ssub.s32 1, %s4
  %s7 = scalar_select 0, %s6, %s4
  $region1: #{tpu_custom_call.1} parent=0
    #allocation2 [shape = 'u8[262144]{0}', space=vmem, size = 0x40000, scoped, tag = 'output window, operand 0']
    #allocation3 [shape = 's32[2]{0}', space=sflag, size = 0x8, scoped, tag = 'scoped memory for tpu_custom_call.1']
    %8 = vsyncpa [#allocation3], 0
    %s9 = scalar_lea.sflag [#allocation3], 1
    %10 = vsyncpa %s9, 0
    loop: start=0, step=1, limit=4
    $region2: #{tpu_custom_call.1} parent=1 // loop_pre_header
      _
    $region3: #{tpu_custom_call.1} parent=1 // loop_header
      %s12 = sphi 0, %s16
      %p13 = scmp.ge.s32.totalorder %s12, 4
      %s22 = sphi 0, %s24
      %s25 = sphi 0, %s22
      %s26 = sphi 0, %s25
      %s42 = sphi 0, %s26
      %s46 = sphi 0, %s46
      %s48 = sphi 0, %s46
      %s49 = sphi 0, %s48
      %s63 = sphi 0, %s49
      %s67 = sphi 0, %s67
      %s69 = sphi 0, %s67
      %s70 = sphi 0, %s69
      %s84 = sphi 0, %s70
      %s90 = sphi 0, %s92
      %s93 = sphi 0, %s90
      %s94 = sphi 0, %s93
      %s110 = sphi 0, %s94
    $region4: #{tpu_custom_call.1} parent=1 // loop_header_branch
      %15 = sbr.rel (%p13) target = $region8
    $region5: #{tpu_custom_call.1} parent=1 // loop_body
      %s17 = ssub.s32 %s12, 1
      %s18 = ssub.s32 %s12, 2
      %s19 = sadd.s32 %s12, 1
      %s20 = ssub.s32 %s12, %s19
      %p21 = scmp.eq.s32.totalorder %s20, 0
      %s23 = sadd.s32 %s22, 1
      %s24 = scalar_select %p21, %s22, %s23
      %p27 = pneg %p21
      %p28 = scmp.eq.s32.totalorder %s12, 1
      %p29 = por %p27, %p28
      %p30 = scmp.ne.s32.totalorder %s22, %s25
      %p31 = scmp.eq.s32.totalorder %s12, 0
      %p32 = por %p30, %p31
      %p33 = scmp.ne.s32.totalorder %s22, %s25
      %p34 = scmp.eq.s32.totalorder %s17, 1
      %p35 = por %p33, %p34
      %p36 = scmp.ne.s32.totalorder %s25, %s26
      %p37 = scmp.eq.s32.totalorder %s17, 0
      %p38 = por %p36, %p37
      %p39 = scmp.ne.s32.totalorder %s25, %s26
      %p40 = scmp.eq.s32.totalorder %s18, 1
      %p41 = por %p39, %p40
      %p43 = scmp.ne.s32.totalorder %s26, %s42
      %p44 = scmp.eq.s32.totalorder %s18, 0
      %p45 = por %p43, %p44
      %s47 = sadd.s32 %s46, 1
      %p50 = scmp.eq.s32.totalorder %s12, 1
      %p51 = scmp.ne.s32.totalorder %s46, %s48
      %p52 = scmp.eq.s32.totalorder %s12, 0
      %p53 = por %p51, %p52
      %p54 = scmp.ne.s32.totalorder %s46, %s48
      %p55 = scmp.eq.s32.totalorder %s17, 1
      %p56 = por %p54, %p55
      %p57 = scmp.ne.s32.totalorder %s48, %s49
      %p58 = scmp.eq.s32.totalorder %s17, 0
      %p59 = por %p57, %p58
      %p60 = scmp.ne.s32.totalorder %s48, %s49
      %p61 = scmp.eq.s32.totalorder %s18, 1
      %p62 = por %p60, %p61
      %p64 = scmp.ne.s32.totalorder %s49, %s63
      %p65 = scmp.eq.s32.totalorder %s18, 0
      %p66 = por %p64, %p65
      %s68 = sadd.s32 %s67, 1
      %p71 = scmp.eq.s32.totalorder %s12, 1
      %p72 = scmp.ne.s32.totalorder %s67, %s69
      %p73 = scmp.eq.s32.totalorder %s12, 0
      %p74 = por %p72, %p73
      %p75 = scmp.ne.s32.totalorder %s67, %s69
      %p76 = scmp.eq.s32.totalorder %s17, 1
      %p77 = por %p75, %p76
      %p78 = scmp.ne.s32.totalorder %s69, %s70
      %p79 = scmp.eq.s32.totalorder %s17, 0
      %p80 = por %p78, %p79
      %p81 = scmp.ne.s32.totalorder %s69, %s70
      %p82 = scmp.eq.s32.totalorder %s18, 1
      %p83 = por %p81, %p82
      %p85 = scmp.ne.s32.totalorder %s70, %s84
      %p86 = scmp.eq.s32.totalorder %s18, 0
      %p87 = por %p85, %p86
      %s88 = ssub.s32 %s12, %s19
      %p89 = scmp.eq.s32.totalorder %s88, 0
      %s91 = sadd.s32 %s90, 1
      %s92 = scalar_select %p89, %s90, %s91
      %p95 = pneg %p89
      %p96 = scmp.eq.s32.totalorder %s12, 1
      %p97 = por %p95, %p96
      %p98 = scmp.ne.s32.totalorder %s90, %s93
      %p99 = scmp.eq.s32.totalorder %s12, 0
      %p100 = por %p98, %p99
      %p101 = scmp.ne.s32.totalorder %s90, %s93
      %p102 = scmp.eq.s32.totalorder %s17, 1
      %p103 = por %p101, %p102
      %p104 = scmp.ne.s32.totalorder %s93, %s94
      %p105 = scmp.eq.s32.totalorder %s17, 0
      %p106 = por %p104, %p105
      %p107 = scmp.ne.s32.totalorder %s93, %s94
      %p108 = scmp.eq.s32.totalorder %s18, 1
      %p109 = por %p107, %p108
      %p111 = scmp.ne.s32.totalorder %s94, %s110
      %p112 = scmp.eq.s32.totalorder %s18, 0
      %p113 = por %p111, %p112
      %p114 = scmp.le.s32.totalorder 1, %s12
      %p115 = scmp.lt.s32.totalorder %s12, 3
      %p116 = pnand %p114, %p115
      %p117 = pneg %p116
      // Predicated region
      $region9: #{tpu_custom_call.1} parent=5 // pred_check
        _
      $region10: #{tpu_custom_call.1} parent=5 // pred_check_branch
        %119 = sbr.rel (%p116) target = $region12
      $region11: #{tpu_custom_call.1} parent=5 // pred_region
        %s120 = ssub.s32 %s12, 1
        // Predicated region
        $region13: #{tpu_custom_call.1} parent=11 // pred_check
          %p121 = pneg %p59
        $region14: #{tpu_custom_call.1} parent=11 // pred_check_branch
          %123 = sbr.rel (%p121) target = $region16
        $region15: #{tpu_custom_call.1} parent=11 // pred_region
          _
        $region16: #{tpu_custom_call.1} parent=11 // pred_fallthru
          _
        // Predicated region
        $region17: #{tpu_custom_call.1} parent=11 // pred_check
          %p124 = pneg %p80
        $region18: #{tpu_custom_call.1} parent=11 // pred_check_branch
          %126 = sbr.rel (%p124) target = $region20
        $region19: #{tpu_custom_call.1} parent=11 // pred_region
          _
        $region20: #{tpu_custom_call.1} parent=11 // pred_fallthru
          _
      $region12: #{tpu_custom_call.1} parent=5 // pred_fallthru
        _
      %p127 = scmp.lt.s32.totalorder %s12, 2
      // Predicated region
      $region21: #{tpu_custom_call.1} parent=5 // pred_check
        %p128 = pneg %p127
      $region22: #{tpu_custom_call.1} parent=5 // pred_check_branch
        %130 = sbr.rel (%p128) target = $region24
      $region23: #{tpu_custom_call.1} parent=5 // pred_region
        // Predicated region
        $region25: #{tpu_custom_call.1} parent=23 // pred_check
          %p131 = pneg %p32
        $region26: #{tpu_custom_call.1} parent=23 // pred_check_branch
          %133 = sbr.rel (%p131) target = $region28
        $region27: #{tpu_custom_call.1} parent=23 // pred_region
          %s134 = smul.u32 32, %s12
          %p135 = scmp.lt.s32.totalorder %s134, 63
          %s136 = scalar_select %p135, %s134, 63
          %s137 = smul.addr %s136, 8
          %s138 = scalar_lea.vmem %s0, %s137
          %s139 = smul.u32 32, %s12
        $region28: #{tpu_custom_call.1} parent=23 // pred_fallthru
          _
      $region24: #{tpu_custom_call.1} parent=5 // pred_fallthru
        _
      %p140 = scmp.le.s32.totalorder 1, %s12
      %p141 = scmp.lt.s32.totalorder %s12, 3
      %p142 = pnand %p140, %p141
      %p143 = pneg %p142
      // Predicated region
      $region29: #{tpu_custom_call.1} parent=5 // pred_check
        _
      $region30: #{tpu_custom_call.1} parent=5 // pred_check_branch
        %145 = sbr.rel (%p142) target = $region32
      $region31: #{tpu_custom_call.1} parent=5 // pred_region
        %s146 = ssub.s32 %s12, 1
        %s147 = smul.u32 32, %s17
        %p148 = scmp.lt.s32.totalorder %s147, 63
        %s149 = scalar_select %p148, %s147, 63
        %s150 = smul.addr %s149, 8
        %s151 = scalar_lea.vmem %s0, %s150
        %p152 = pneg %p38
        %p153 = pneg %p35
        %p154 = pneg %p59
        %p155 = pneg %p56
        %p156 = pneg %p80
        %p157 = pneg %p77
        %p158 = pneg %p106
        %p159 = pneg %p103
        %s160 = sand.u32 %s93, 1
        %s161 = scalar_lea.sflag [#allocation3], %s160
        %s162 = sand.u32 %s93, 1
        %s163 = smul.addr %s162, 256
        %s164 = scalar_lea.vmem [#allocation2], %s163
        %s165 = smul.u32 32, %s17
        %p166 = scmp.lt.s32.totalorder %s165, 63
        %s167 = scalar_select %p166, %s165, 63
        %s168 = smul.addr %s167, 8
        %s169 = scalar_lea.vmem %s0, %s168
        %s170 = smul.u32 32, %s17
        %s171 = smul.u32 32, %s17
        %v172 = vld [vmem:[%s169] sm:$0xff]
        %v173 = vld [vmem:[%s169 + $0x8] sm:$0xff]
        %v174 = vld [vmem:[%s169 + $0x10] sm:$0xff]
        %v175 = vld [vmem:[%s169 + $0x18] sm:$0xff]
        %v176 = vld [vmem:[%s169 + $0x20] sm:$0xff]
        %v177 = vld [vmem:[%s169 + $0x28] sm:$0xff]
        %v178 = vld [vmem:[%s169 + $0x30] sm:$0xff]
        %v179 = vld [vmem:[%s169 + $0x38] sm:$0xff]
        %v180 = vld [vmem:[%s169 + $0x40] sm:$0xff]
        %v181 = vld [vmem:[%s169 + $0x48] sm:$0xff]
        %v182 = vld [vmem:[%s169 + $0x50] sm:$0xff]
        %v183 = vld [vmem:[%s169 + $0x58] sm:$0xff]
        %v184 = vld [vmem:[%s169 + $0x60] sm:$0xff]
        %v185 = vld [vmem:[%s169 + $0x68] sm:$0xff]
        %v186 = vld [vmem:[%s169 + $0x70] sm:$0xff]
        %v187 = vld [vmem:[%s169 + $0x78] sm:$0xff]
        %v188 = vld [vmem:[%s169 + $0x80] sm:$0xff]
        %v189 = vld [vmem:[%s169 + $0x88] sm:$0xff]
        %v190 = vld [vmem:[%s169 + $0x90] sm:$0xff]
        %v191 = vld [vmem:[%s169 + $0x98] sm:$0xff]
        %v192 = vld [vmem:[%s169 + $0xa0] sm:$0xff]
        %v193 = vld [vmem:[%s169 + $0xa8] sm:$0xff]
        %v194 = vld [vmem:[%s169 + $0xb0] sm:$0xff]
        %v195 = vld [vmem:[%s169 + $0xb8] sm:$0xff]
        %v196 = vld [vmem:[%s169 + $0xc0] sm:$0xff]
        %v197 = vld [vmem:[%s169 + $0xc8] sm:$0xff]
        %v198 = vld [vmem:[%s169 + $0xd0] sm:$0xff]
        %v199 = vld [vmem:[%s169 + $0xd8] sm:$0xff]
        %v200 = vld [vmem:[%s169 + $0xe0] sm:$0xff]
        %v201 = vld [vmem:[%s169 + $0xe8] sm:$0xff]
        %v202 = vld [vmem:[%s169 + $0xf0] sm:$0xff]
        %v203 = vld [vmem:[%s169 + $0xf8] sm:$0xff]
        %v204 = vld [vmem:[%s1] sm:$0xff]
        %v205 = vld [vmem:[%s1 + $0x8] sm:$0xff]
        %v206 = vld [vmem:[%s1 + $0x10] sm:$0xff]
        %v207 = vld [vmem:[%s1 + $0x18] sm:$0xff]
        %v208 = vld [vmem:[%s1 + $0x20] sm:$0xff]
        %v209 = vld [vmem:[%s2] sm:$0x1]
        %v211 = vlaneseq
        %v212 = vshrl.u32 %v211, 7
        %v213 = vsub.s32 0, %v212
        %v214 = vrot.slane %v209, %v213
        %vm216 = vcmask 326656
        %v218 = vsel %vm216, %v172, 0
        %v221 = vsel %vm216, %v173, 0
        %v224 = vsel %vm216, %v174, 0
        %v227 = vsel %vm216, %v175, 0
        %v230 = vsel %vm216, %v176, 0
        %v233 = vsel %vm216, %v177, 0
        %v236 = vsel %vm216, %v178, 0
        %v239 = vsel %vm216, %v179, 0
        %v242 = vsel %vm216, %v180, 0
        %v245 = vsel %vm216, %v181, 0
        %v248 = vsel %vm216, %v182, 0
        %v251 = vsel %vm216, %v183, 0
        %v254 = vsel %vm216, %v184, 0
        %v257 = vsel %vm216, %v185, 0
        %v260 = vsel %vm216, %v186, 0
        %v263 = vsel %vm216, %v187, 0
        %v266 = vsel %vm216, %v188, 0
        %v269 = vsel %vm216, %v189, 0
        %v272 = vsel %vm216, %v190, 0
        %v275 = vsel %vm216, %v191, 0
        %v278 = vsel %vm216, %v192, 0
        %v281 = vsel %vm216, %v193, 0
        %v284 = vsel %vm216, %v194, 0
        %v287 = vsel %vm216, %v195, 0
        %v290 = vsel %vm216, %v196, 0
        %v293 = vsel %vm216, %v197, 0
        %v296 = vsel %vm216, %v198, 0
        %v299 = vsel %vm216, %v199, 0
        %v302 = vsel %vm216, %v200, 0
        %v305 = vsel %vm216, %v201, 0
        %v308 = vsel %vm216, %v202, 0
        %v311 = vsel %vm216, %v203, 0
        %313 = vmatprep.subr.mxu0 0.0
        %314 = vmatpush1.msra.mxu0 %v204
        %315 = vmatprep.subr.mxu0 0.0
        %316 = vmatpush1.msra.mxu0 %v205
        %317 = vmatprep.subr.mxu0 0.0
        %318 = vmatpush1.msra.mxu0 %v206
        %319 = vmatprep.subr.mxu0 0.0
        %320 = vmatpush1.msra.mxu0 %v207
        %321 = vmatprep.subr.mxu0 0.0
        %322 = vmatpush1.msra.mxu0 %v208
        %323 = vmatprep.subr.mxu0 0.0
        %324 = vmatpush1.msra.mxu0 0.0
        %325 = vmatprep.subr.mxu0 0.0
        %326 = vmatpush1.msra.mxu0 0.0
        %327 = vmatprep.subr.mxu0 0.0
        %328 = vmatpush1.msra.mxu0 0.0
        %329 = vmatprep.subr.mxu0 0.0
        %330 = vmatpush1.msra.mxu0 0.0
        %331 = vmatprep.subr.mxu0 0.0
        %332 = vmatpush1.msra.mxu0 0.0
        %333 = vmatprep.subr.mxu0 0.0
        %334 = vmatpush1.msra.mxu0 0.0
        %335 = vmatprep.subr.mxu0 0.0
        %336 = vmatpush1.msra.mxu0 0.0
        %337 = vmatprep.subr.mxu0 0.0
        %338 = vmatpush1.msra.mxu0 0.0
        %339 = vmatprep.subr.mxu0 0.0
        %340 = vmatpush1.msra.mxu0 0.0
        %341 = vmatprep.subr.mxu0 0.0
        %342 = vmatpush1.msra.mxu0 0.0
        %343 = vmatprep.subr.mxu0 0.0
        %344 = vmatpush1.msra.mxu0 0.0
        %345 = vmatprep.subr.mxu0 0.0
        %346 = vmatpush1.msra.mxu0 0.0
        %347 = vmatprep.subr.mxu0 0.0
        %348 = vmatpush1.msra.mxu0 0.0
        %349 = vmatprep.subr.mxu0 0.0
        %350 = vmatpush1.msra.mxu0 0.0
        %351 = vmatprep.subr.mxu0 0.0
        %352 = vmatpush1.msra.mxu0 0.0
        %353 = vmatprep.subr.mxu0 0.0
        %354 = vmatpush1.msra.mxu0 0.0
        %355 = vmatprep.subr.mxu0 0.0
        %356 = vmatpush1.msra.mxu0 0.0
        %357 = vmatprep.subr.mxu0 0.0
        %358 = vmatpush1.msra.mxu0 0.0
        %359 = vmatprep.subr.mxu0 0.0
        %360 = vmatpush1.msra.mxu0 0.0
        %361 = vmatprep.subr.mxu0 0.0
        %362 = vmatpush1.msra.mxu0 0.0
        %363 = vmatprep.subr.mxu0 0.0
        %364 = vmatpush1.msra.mxu0 0.0
        %365 = vmatprep.subr.mxu0 0.0
        %366 = vmatpush1.msra.mxu0 0.0
        %367 = vmatprep.subr.mxu0 0.0
        %368 = vmatpush1.msra.mxu0 0.0
        %369 = vmatprep.subr.mxu0 0.0
        %370 = vmatpush1.msra.mxu0 0.0
        %371 = vmatprep.subr.mxu0 0.0
        %372 = vmatpush1.msra.mxu0 0.0
        %373 = vmatprep.subr.mxu0 0.0
        %374 = vmatpush1.msra.mxu0 0.0
        %375 = vmatprep.subr.mxu0 0.0
        %376 = vmatpush1.msra.mxu0 0.0
        %377 = vmatprep.mubr.f32.mxu0 0.0
        %378 = vmatmul.mubr.f32.gmra.mrb[0].mxu0 %v218
        %v379 = vpop.f32.mrb[0].mxu0
        %v380 = vadd.f32 %v214, %v379
        %v381 = vpop.f32.mrb[0].mxu0
        %382 = vmatprep.mubr.f32.mxu0 0.0
        %383 = vmatmul.mubr.f32.gmra.mrb[0].mxu0 %v221
        %v384 = vpop.f32.mrb[0].mxu0
        %v385 = vadd.f32 %v214, %v384
        %v386 = vpop.f32.mrb[0].mxu0
        %387 = vmatprep.mubr.f32.mxu0 0.0
        %388 = vmatmul.mubr.f32.gmra.mrb[0].mxu0 %v224
        %v389 = vpop.f32.mrb[0].mxu0
        %v390 = vadd.f32 %v214, %v389
        %v391 = vpop.f32.mrb[0].mxu0
        %392 = vmatprep.mubr.f32.mxu0 0.0
        %393 = vmatmul.mubr.f32.gmra.mrb[0].mxu0 %v227
        %v394 = vpop.f32.mrb[0].mxu0
        %v395 = vadd.f32 %v214, %v394
        %v396 = vpop.f32.mrb[0].mxu0
        %397 = vmatprep.mubr.f32.mxu0 0.0
        %398 = vmatmul.mubr.f32.gmra.mrb[0].mxu0 %v230
        %v399 = vpop.f32.mrb[0].mxu0
        %v400 = vadd.f32 %v214, %v399
        %v401 = vpop.f32.mrb[0].mxu0
        %402 = vmatprep.mubr.f32.mxu0 0.0
        %403 = vmatmul.mubr.f32.gmra.mrb[0].mxu0 %v233
        %v404 = vpop.f32.mrb[0].mxu0
        %v405 = vadd.f32 %v214, %v404
        %v406 = vpop.f32.mrb[0].mxu0
        %407 = vmatprep.mubr.f32.mxu0 0.0
        %408 = vmatmul.mubr.f32.gmra.mrb[0].mxu0 %v236
        %v409 = vpop.f32.mrb[0].mxu0
        %v410 = vadd.f32 %v214, %v409
        %v411 = vpop.f32.mrb[0].mxu0
        %412 = vmatprep.mubr.f32.mxu0 0.0
        %413 = vmatmul.mubr.f32.gmra.mrb[0].mxu0 %v239
        %v414 = vpop.f32.mrb[0].mxu0
        %v415 = vadd.f32 %v214, %v414
        %v416 = vpop.f32.mrb[0].mxu0
        %417 = vmatprep.mubr.f32.mxu0 0.0
        %418 = vmatmul.mubr.f32.gmra.mrb[0].mxu0 %v242
        %v419 = vpop.f32.mrb[0].mxu0
        %v420 = vadd.f32 %v214, %v419
        %v421 = vpop.f32.mrb[0].mxu0
        %422 = vmatprep.mubr.f32.mxu0 0.0
        %423 = vmatmul.mubr.f32.gmra.mrb[0].mxu0 %v245
        %v424 = vpop.f32.mrb[0].mxu0
        %v425 = vadd.f32 %v214, %v424
        %v426 = vpop.f32.mrb[0].mxu0
        %427 = vmatprep.mubr.f32.mxu0 0.0
        %428 = vmatmul.mubr.f32.gmra.mrb[0].mxu0 %v248
        %v429 = vpop.f32.mrb[0].mxu0
        %v430 = vadd.f32 %v214, %v429
        %v431 = vpop.f32.mrb[0].mxu0
        %432 = vmatprep.mubr.f32.mxu0 0.0
        %433 = vmatmul.mubr.f32.gmra.mrb[0].mxu0 %v251
        %v434 = vpop.f32.mrb[0].mxu0
        %v435 = vadd.f32 %v214, %v434
        %v436 = vpop.f32.mrb[0].mxu0
        %437 = vmatprep.mubr.f32.mxu0 0.0
        %438 = vmatmul.mubr.f32.gmra.mrb[0].mxu0 %v254
        %v439 = vpop.f32.mrb[0].mxu0
        %v440 = vadd.f32 %v214, %v439
        %v441 = vpop.f32.mrb[0].mxu0
        %442 = vmatprep.mubr.f32.mxu0 0.0
        %443 = vmatmul.mubr.f32.gmra.mrb[0].mxu0 %v257
        %v444 = vpop.f32.mrb[0].mxu0
        %v445 = vadd.f32 %v214, %v444
        %v446 = vpop.f32.mrb[0].mxu0
        %447 = vmatprep.mubr.f32.mxu0 0.0
        %448 = vmatmul.mubr.f32.gmra.mrb[0].mxu0 %v260
        %v449 = vpop.f32.mrb[0].mxu0
        %v450 = vadd.f32 %v214, %v449
        %v451 = vpop.f32.mrb[0].mxu0
        %452 = vmatprep.mubr.f32.mxu0 0.0
        %453 = vmatmul.mubr.f32.gmra.mrb[0].mxu0 %v263
        %v454 = vpop.f32.mrb[0].mxu0
        %v455 = vadd.f32 %v214, %v454
        %v456 = vpop.f32.mrb[0].mxu0
        %457 = vmatprep.mubr.f32.mxu0 0.0
        %458 = vmatmul.mubr.f32.gmra.mrb[0].mxu0 %v266
        %v459 = vpop.f32.mrb[0].mxu0
        %v460 = vadd.f32 %v214, %v459
        %v461 = vpop.f32.mrb[0].mxu0
        %462 = vmatprep.mubr.f32.mxu0 0.0
        %463 = vmatmul.mubr.f32.gmra.mrb[0].mxu0 %v269
        %v464 = vpop.f32.mrb[0].mxu0
        %v465 = vadd.f32 %v214, %v464
        %v466 = vpop.f32.mrb[0].mxu0
        %467 = vmatprep.mubr.f32.mxu0 0.0
        %468 = vmatmul.mubr.f32.gmra.mrb[0].mxu0 %v272
        %v469 = vpop.f32.mrb[0].mxu0
        %v470 = vadd.f32 %v214, %v469
        %v471 = vpop.f32.mrb[0].mxu0
        %472 = vmatprep.mubr.f32.mxu0 0.0
        %473 = vmatmul.mubr.f32.gmra.mrb[0].mxu0 %v275
        %v474 = vpop.f32.mrb[0].mxu0
        %v475 = vadd.f32 %v214, %v474
        %v476 = vpop.f32.mrb[0].mxu0
        %477 = vmatprep.mubr.f32.mxu0 0.0
        %478 = vmatmul.mubr.f32.gmra.mrb[0].mxu0 %v278
        %v479 = vpop.f32.mrb[0].mxu0
        %v480 = vadd.f32 %v214, %v479
        %v481 = vpop.f32.mrb[0].mxu0
        %482 = vmatprep.mubr.f32.mxu0 0.0
        %483 = vmatmul.mubr.f32.gmra.mrb[0].mxu0 %v281
        %v484 = vpop.f32.mrb[0].mxu0
        %v485 = vadd.f32 %v214, %v484
        %v486 = vpop.f32.mrb[0].mxu0
        %487 = vmatprep.mubr.f32.mxu0 0.0
        %488 = vmatmul.mubr.f32.gmra.mrb[0].mxu0 %v284
        %v489 = vpop.f32.mrb[0].mxu0
        %v490 = vadd.f32 %v214, %v489
        %v491 = vpop.f32.mrb[0].mxu0
        %492 = vmatprep.mubr.f32.mxu0 0.0
        %493 = vmatmul.mubr.f32.gmra.mrb[0].mxu0 %v287
        %v494 = vpop.f32.mrb[0].mxu0
        %v495 = vadd.f32 %v214, %v494
        %v496 = vpop.f32.mrb[0].mxu0
        %497 = vmatprep.mubr.f32.mxu0 0.0
        %498 = vmatmul.mubr.f32.gmra.mrb[0].mxu0 %v290
        %v499 = vpop.f32.mrb[0].mxu0
        %v500 = vadd.f32 %v214, %v499
        %v501 = vpop.f32.mrb[0].mxu0
        %502 = vmatprep.mubr.f32.mxu0 0.0
        %503 = vmatmul.mubr.f32.gmra.mrb[0].mxu0 %v293
        %v504 = vpop.f32.mrb[0].mxu0
        %v505 = vadd.f32 %v214, %v504
        %v506 = vpop.f32.mrb[0].mxu0
        %507 = vmatprep.mubr.f32.mxu0 0.0
        %508 = vmatmul.mubr.f32.gmra.mrb[0].mxu0 %v296
        %v509 = vpop.f32.mrb[0].mxu0
        %v510 = vadd.f32 %v214, %v509
        %v511 = vpop.f32.mrb[0].mxu0
        %512 = vmatprep.mubr.f32.mxu0 0.0
        %513 = vmatmul.mubr.f32.gmra.mrb[0].mxu0 %v299
        %v514 = vpop.f32.mrb[0].mxu0
        %v515 = vadd.f32 %v214, %v514
        %v516 = vpop.f32.mrb[0].mxu0
        %517 = vmatprep.mubr.f32.mxu0 0.0
        %518 = vmatmul.mubr.f32.gmra.mrb[0].mxu0 %v302
        %v519 = vpop.f32.mrb[0].mxu0
        %v520 = vadd.f32 %v214, %v519
        %v521 = vpop.f32.mrb[0].mxu0
        %522 = vmatprep.mubr.f32.mxu0 0.0
        %523 = vmatmul.mubr.f32.gmra.mrb[0].mxu0 %v305
        %v524 = vpop.f32.mrb[0].mxu0
        %v525 = vadd.f32 %v214, %v524
        %v526 = vpop.f32.mrb[0].mxu0
        %527 = vmatprep.mubr.f32.mxu0 0.0
        %528 = vmatmul.mubr.f32.gmra.mrb[0].mxu0 %v308
        %v529 = vpop.f32.mrb[0].mxu0
        %v530 = vadd.f32 %v214, %v529
        %v531 = vpop.f32.mrb[0].mxu0
        %532 = vmatprep.mubr.f32.mxu0 0.0
        %533 = vmatmul.mubr.f32.gmra.mrb[0].mxu0 %v311
        %v534 = vpop.f32.mrb[0].mxu0
        %v535 = vadd.f32 %v214, %v534
        %v536 = vpop.f32.mrb[0].mxu0
        %537 = vdwg.mxu0
        %538 = vst [vmem:[%s164] sm:$0xff] %v380
        %539 = vst [vmem:[%s164 + $0x8] sm:$0xff] %v385
        %540 = vst [vmem:[%s164 + $0x10] sm:$0xff] %v390
        %541 = vst [vmem:[%s164 + $0x18] sm:$0xff] %v395
        %542 = vst [vmem:[%s164 + $0x20] sm:$0xff] %v400
        %543 = vst [vmem:[%s164 + $0x28] sm:$0xff] %v405
        %544 = vst [vmem:[%s164 + $0x30] sm:$0xff] %v410
        %545 = vst [vmem:[%s164 + $0x38] sm:$0xff] %v415
        %546 = vst [vmem:[%s164 + $0x40] sm:$0xff] %v420
        %547 = vst [vmem:[%s164 + $0x48] sm:$0xff] %v425
        %548 = vst [vmem:[%s164 + $0x50] sm:$0xff] %v430
        %549 = vst [vmem:[%s164 + $0x58] sm:$0xff] %v435
        %550 = vst [vmem:[%s164 + $0x60] sm:$0xff] %v440
        %551 = vst [vmem:[%s164 + $0x68] sm:$0xff] %v445
        %552 = vst [vmem:[%s164 + $0x70] sm:$0xff] %v450
        %553 = vst [vmem:[%s164 + $0x78] sm:$0xff] %v455
        %554 = vst [vmem:[%s164 + $0x80] sm:$0xff] %v460
        %555 = vst [vmem:[%s164 + $0x88] sm:$0xff] %v465
        %556 = vst [vmem:[%s164 + $0x90] sm:$0xff] %v470
        %557 = vst [vmem:[%s164 + $0x98] sm:$0xff] %v475
        %558 = vst [vmem:[%s164 + $0xa0] sm:$0xff] %v480
        %559 = vst [vmem:[%s164 + $0xa8] sm:$0xff] %v485
        %560 = vst [vmem:[%s164 + $0xb0] sm:$0xff] %v490
        %561 = vst [vmem:[%s164 + $0xb8] sm:$0xff] %v495
        %562 = vst [vmem:[%s164 + $0xc0] sm:$0xff] %v500
        %563 = vst [vmem:[%s164 + $0xc8] sm:$0xff] %v505
        %564 = vst [vmem:[%s164 + $0xd0] sm:$0xff] %v510
        %565 = vst [vmem:[%s164 + $0xd8] sm:$0xff] %v515
        %566 = vst [vmem:[%s164 + $0xe0] sm:$0xff] %v520
        %567 = vst [vmem:[%s164 + $0xe8] sm:$0xff] %v525
        %568 = vst [vmem:[%s164 + $0xf0] sm:$0xff] %v530
        %569 = vst [vmem:[%s164 + $0xf8] sm:$0xff] %v535
        %s570 = sand.u32 %s93, 1
        %s571 = scalar_lea.sflag [#allocation3], %s570
        %s572 = sand.u32 %s93, 1
        %s573 = smul.addr %s572, 256
        %s574 = scalar_lea.vmem [#allocation2], %s573
        // Predicated region
        $region33: #{tpu_custom_call.1} parent=31 // pred_check
          %p575 = pneg %p103
        $region34: #{tpu_custom_call.1} parent=31 // pred_check_branch
          %577 = sbr.rel (%p575) target = $region36
        $region35: #{tpu_custom_call.1} parent=31 // pred_region
          %s578 = smul.u32 32, %s17
          %s580 = ssub.s32 4096, 4096
          %581 = vsyncadd %s571, %s580
          %s582 = smul.addr %s578, 128
          %s583 = scalar_lea.hbm %s3, %s582
          %s584 = sshll.u32 %s574, 4
          %s585 = int_to_ptr.vmem [resolvable:$true] %s584
          %590 = dma.vmem_to_hbm [thread:$0]  %s585, 4096, %s583, %s571, 128, 128, 8
        $region36: #{tpu_custom_call.1} parent=31 // pred_fallthru
          _
      $region32: #{tpu_custom_call.1} parent=5 // pred_fallthru
        _
      %p591 = scmp.le.s32.totalorder 2, %s12
      // Predicated region
      $region37: #{tpu_custom_call.1} parent=5 // pred_check
        %p592 = pneg %p591
      $region38: #{tpu_custom_call.1} parent=5 // pred_check_branch
        %594 = sbr.rel (%p592) target = $region40
      $region39: #{tpu_custom_call.1} parent=5 // pred_region
        %s595 = ssub.s32 %s12, 2
        // Predicated region
        $region41: #{tpu_custom_call.1} parent=39 // pred_check
          %p596 = pneg %p109
        $region42: #{tpu_custom_call.1} parent=39 // pred_check_branch
          %598 = sbr.rel (%p596) target = $region44
        $region43: #{tpu_custom_call.1} parent=39 // pred_region
          %s599 = sand.u32 %s94, 1
          %s600 = scalar_lea.sflag [#allocation3], %s599
          %s601 = sand.u32 %s94, 1
          %s602 = smul.addr %s601, 256
          %s603 = scalar_lea.vmem [#allocation2], %s602
          %604 = dma.done %s600, 4096
        $region44: #{tpu_custom_call.1} parent=39 // pred_fallthru
          _
      $region40: #{tpu_custom_call.1} parent=5 // pred_fallthru
        _
    $region6: #{tpu_custom_call.1} parent=1 // loop_footer
      %s16 = sadd.s32 1, %s12
    $region7: #{tpu_custom_call.1} parent=1 // loop_footer_branch
      %11 = sbr.rel target = $region3
    $region8: #{tpu_custom_call.1} parent=1 // loop_exit
      _
    %605 = vsyncpa [#allocation3], 1
    %s606 = scalar_lea.sflag [#allocation3], 1
    %607 = vsyncpa %s606, 1

</llo_original>
